<compile_context>
chip_gen: v7x
topology: tpu7x:2x2x1
jax: 0.10.0
libtpu: 0.0.40
codegen_flags: <defaults>
</compile_context>

<pallas_src>
import jax
import jax.numpy as jnp
from jax.experimental import pallas as pl
from jax.experimental.pallas import tpu as pltpu


def _masked_avg_pool_kernel(x_ref, o_ref):
    # x_ref: (TM, C) rows of the flattened (B*F, C) input.
    # o_ref: (1, TM) lane-dense slab of per-row pooled values.
    x = x_ref[...].astype(jnp.float32)
    num = jnp.sum(x, axis=-1)                               # (TM,) f32 accumulation
    cnt = jnp.sum((x != 0.0).astype(jnp.float32), axis=-1)  # exact nonzero count (C < 2^24)
    # 0/0 -> NaN for fully-masked rows, matching the PyTorch reference.
    o_ref[...] = (num / cnt)[None, :].astype(o_ref.dtype)
    # TODO(synk): if an xprof trace shows the XLU as the binding unit for very
    # small C, re-route the two row reductions through the idle MXU (dot against
    # a ones(C, 1) constant) instead of the lane-axis jnp.sum.


def _round_up(v: int, m: int) -> int:
    return ((v + m - 1) // m) * m


def _sublane_tile(dtype) -> int:
    itemsize = jnp.dtype(dtype).itemsize
    if itemsize >= 4:
        return 8
    if itemsize == 2:
        return 16
    return 32


def _choose_row_tile(n_rows: int, c: int, dtype,
                     target_bytes: int = 8 * 1024 * 1024) -> int:
    """Rows per tile, sized from the *padded* VMEM footprint."""
    itemsize = jnp.dtype(dtype).itemsize
    sub = _sublane_tile(dtype)
    padded_row_bytes = _round_up(max(c, 1), 128) * itemsize  # lanes pad to 128 in VMEM
    tm = max(sub, target_bytes // padded_row_bytes)

    # >= 4 grid steps (>= 2 per v7x TensorCore) when the row count allows it, so
    # double-buffering overlaps DMA with compute and both cores stay busy.
    min_steps = 4
    if n_rows >= min_steps * 128:
        tm = min(tm, _round_up(pl.cdiv(n_rows, min_steps), 128))

    # Never (much) larger than the problem.
    tm = min(tm, _round_up(n_rows, sub))

    # Multiples of 128 keep the (1, TM) output stores lane-dense.
    if tm >= 128:
        tm = (tm // 128) * 128
        grain = 128
    else:
        tm = _round_up(tm, sub)
        grain = sub

    # Mild preference for an even tile count (megacore balance); only shrink a little.
    nt = pl.cdiv(n_rows, tm)
    if nt > 1 and nt % 2 == 1:
        for cand in (tm - grain, tm - 2 * grain):
            if cand >= grain and pl.cdiv(n_rows, cand) % 2 == 0:
                tm = cand
                break
    return tm


def masked_avg_pool(x: jax.Array) -> jax.Array:
    """x: (B, F, C) float array -> (B, F, 1) masked channel average."""
    B, F, C = x.shape
    n = B * F
    x2 = x.reshape(n, C)  # free reshape (contiguous)

    tm = _choose_row_tile(n, C, x2.dtype)
    num_tiles = pl.cdiv(n, tm)
    itemsize = x2.dtype.itemsize

    # Padded VMEM footprint: double-buffered input + output tile, plus slack.
    in_tile_bytes = tm * _round_up(C, 128) * itemsize
    out_tile_bytes = 8 * _round_up(tm, 128) * itemsize
    vmem_limit = int(min(max(2 * (in_tile_bytes + out_tile_bytes) + (4 << 20),
                             32 << 20), 48 << 20))

    cost = pl.CostEstimate(
        flops=2 * n * C,
        transcendentals=0,
        bytes_accessed=n * C * itemsize + n * itemsize,
    )

    out2 = pl.pallas_call(
        _masked_avg_pool_kernel,
        out_shape=jax.ShapeDtypeStruct((1, num_tiles * tm), x.dtype),
        grid=(num_tiles,),
        in_specs=[pl.BlockSpec((tm, C), lambda i: (i, 0))],
        out_specs=pl.BlockSpec((1, tm), lambda i: (0, i)),
        compiler_params=pltpu.CompilerParams(
            dimension_semantics=("parallel",),
            vmem_limit_bytes=vmem_limit,
        ),
        cost_estimate=cost,
    )(x2)

    # Trim tile padding; unsqueeze(2) is free layout plumbing.
    return out2[0, :n].reshape(B, F, 1)


if __name__ == "__main__":
    key = jax.random.PRNGKey(0)
    B, F, C = 2, 16, 32
    x = jax.random.normal(key, (B, F, C), dtype=jnp.float32)
    # Introduce zero-masked entries (what the module is designed to skip).
    drop = jax.random.bernoulli(jax.random.PRNGKey(1), p=0.4, shape=(B, F, C))
    x = jnp.where(drop, 0.0, x)
    # Force one fully-masked row to exercise the 0/0 -> NaN path.
    x = x.at[0, 3, :].set(0.0)

    out = masked_avg_pool(x)
    jax.block_until_ready(out)

    # Pure-JAX reference check.
    mask = (x != 0)
    ref = (x * mask).sum(axis=2) / mask.sum(axis=2)
    ref = ref[..., None]
    assert out.shape == (B, F, 1)
    assert jnp.allclose(out, ref, atol=1e-6, rtol=1e-6, equal_nan=True), \
        "mismatch vs reference"
    assert bool(jnp.isnan(out[0, 3, 0])), "fully-masked row should be NaN"

    print("KERNEL_OK")
</pallas_src>

<mosaic_0001>
module attributes {stable_mosaic.version = 11 : i64} {
  func.func @_masked_avg_pool_kernel(%arg0: i32, %arg1: memref<32x32xf32, #tpu.memory_space<vmem>>, %arg2: memref<1x32xf32, #tpu.memory_space<vmem>>) attributes {dimension_semantics = [#tpu.dimension_semantics<parallel>], iteration_bounds = array<i64: 1>, scalar_prefetch = 0 : i64, scratch_operands = 0 : i64, tpu.core_type = #tpu.core_type<tc>, window_params = [{transform_indices = @transform_0, window_bounds = array<i64: 32, 32>}, {transform_indices = @transform_1, window_bounds = array<i64: 1, 32>}]} {
    %c0 = arith.constant 0 : index
    %c0_0 = arith.constant 0 : index
    %0 = vector.load %arg1[%c0, %c0_0] : memref<32x32xf32, #tpu.memory_space<vmem>>, vector<32x32xf32>
    %cst = arith.constant dense<0.000000e+00> : vector<32xf32>
    %1 = vector.multi_reduction <add>, %0, %cst [1] : vector<32x32xf32> to vector<32xf32>
    %cst_1 = arith.constant 0.000000e+00 : f32
    %2 = vector.broadcast %cst_1 : f32 to vector<32x32xf32>
    %3 = arith.cmpf one, %0, %2 : vector<32x32xf32>
    %4 = arith.extui %3 : vector<32x32xi1> to vector<32x32xi32>
    %5 = arith.sitofp %4 : vector<32x32xi32> to vector<32x32xf32>
    %cst_2 = arith.constant dense<0.000000e+00> : vector<32xf32>
    %6 = vector.multi_reduction <add>, %5, %cst_2 [1] : vector<32x32xf32> to vector<32xf32>
    %7 = arith.divf %1, %6 : vector<32xf32>
    %8 = vector.shape_cast %7 : vector<32xf32> to vector<1x32xf32>
    %c0_3 = arith.constant 0 : index
    %c0_4 = arith.constant 0 : index
    %9 = vector.load %arg2[%c0_3, %c0_4] : memref<1x32xf32, #tpu.memory_space<vmem>>, vector<1x32xf32>
    tpu.vector_store %arg2[%c0_3, %c0_4], %8 {strides = array<i32>} : memref<1x32xf32, #tpu.memory_space<vmem>>, vector<1x32xf32>,
    return
  }
  func.func @transform_0(%arg0: i32) -> (i32, i32) {
    %c0_i32 = arith.constant 0 : i32
    %c0_i32_0 = arith.constant 0 : i32
    return %arg0, %c0_i32 : i32, i32
  }
  func.func @transform_1(%arg0: i32) -> (i32, i32) {
    %c0_i32 = arith.constant 0 : i32
    %c0_i32_0 = arith.constant 0 : i32
    return %c0_i32, %arg0 : i32, i32
  }
}

</mosaic_0001>

<llo_original>
// kernel: tpu_custom_call.1
$region0: #{tpu_custom_call.1}
  #allocation0 [shape = 'u32[]', space=smem, size = 0x4, offset = 0x4, fixed_abs, tag = 'smem constant byte address 0x4 - core index']
  #allocation1 [shape = 'u32[144,128]{1,0:T(1,128)}', space=vmem, size = 0x12000, scoped, tag = 'internal scratch']
  %s0 = inlined_call_operand.hbm [shape: f32[32,32], index: 0, kind: input, shape index: {}]
  %s1 = inlined_call_operand.hbm [shape: f32[1,32], index: 1, kind: output, shape index: {}]
  %s2 = sld [smem:[#allocation0]]
  $region18: #{tpu_custom_call.1} parent=0
    _
  %s4 = ssub.s32 1, %s2
  %s5 = scalar_select 0, %s4, %s2
  $region1: #{tpu_custom_call.1} parent=0
    #allocation2 [shape = 'u8[16384]{0}', space=vmem, size = 0x4000, scoped, tag = 'input window, operand 0, single buffered']
    #allocation3 [shape = 's32[1]{0}', space=sflag, size = 0x4, scoped, tag = 'scoped memory for tpu_custom_call.1']
    #allocation4 [shape = 's32[1]{0}', space=sflag, size = 0x4, scoped, tag = 'scoped memory for tpu_custom_call.1']
    #allocation5 [shape = 'u8[512]{0}', space=vmem, size = 0x400, scoped, tag = 'output window, operand 0, single buffered']
    %6 = vsyncpa [#allocation3], 0
    %7 = vsyncpa [#allocation4], 0
    // Predicated region
    $region2: #{tpu_custom_call.1} parent=1 // pred_check
      _
    $region3: #{tpu_custom_call.1} parent=1 // pred_check_branch
      %9 = sbr.rel (0) target = $region5
    $region4: #{tpu_custom_call.1} parent=1 // pred_region
      %s11 = ssub.s32 512, 512
      %12 = vsyncadd [#allocation3], %s11
      %s13 = sshll.u32 [#allocation2], 4
      %s14 = int_to_ptr.vmem [resolvable:$true] %s13
      %19 = dma.hbm_to_vmem [thread:$0]  %s0, 512, %s14, [#allocation3], 128, 128, 8
    $region5: #{tpu_custom_call.1} parent=1 // pred_fallthru
      _
    // Predicated region
    $region6: #{tpu_custom_call.1} parent=1 // pred_check
      _
    $region7: #{tpu_custom_call.1} parent=1 // pred_check_branch
      %21 = sbr.rel (0) target = $region9
    $region8: #{tpu_custom_call.1} parent=1 // pred_region
      %22 = dma.done [#allocation3], 512
    $region9: #{tpu_custom_call.1} parent=1 // pred_fallthru
      _
    %v23 = vld [vmem:[#allocation2] sm:$0xff]
    %v24 = vld [vmem:[#allocation2 + $0x8] sm:$0xff]
    %v25 = vld [vmem:[#allocation2 + $0x10] sm:$0xff]
    %v26 = vld [vmem:[#allocation2 + $0x18] sm:$0xff]
    %vm27 = vcmask 261120
    %v28 = vsel %vm27, %v23, 0.0
    %29 = vadd.xlane.f32.xlu0 %v28
    %v30 = vpop.xlane.xlu0 %29
    %v31 = vsel %vm27, %v24, 0.0
    %32 = vadd.xlane.f32.xlu0 %v31
    %v33 = vpop.xlane.xlu0 %32
    %v34 = vsel %vm27, %v25, 0.0
    %35 = vadd.xlane.f32.xlu0 %v34
    %v36 = vpop.xlane.xlu0 %35
    %v37 = vsel %vm27, %v26, 0.0
    %38 = vadd.xlane.f32.xlu0 %v37
    %v39 = vpop.xlane.xlu0 %38
    %vm40 = vcmp.ne.f32.partialorder %v23, 0.0
    %vm41 = vcmp.ne.f32.partialorder %v24, 0.0
    %vm42 = vcmp.ne.f32.partialorder %v25, 0.0
    %vm43 = vcmp.ne.f32.partialorder %v26, 0.0
    %v44 = vsel %vm40, 1, 0
    %v45 = vsel %vm41, 1, 0
    %v46 = vsel %vm42, 1, 0
    %v47 = vsel %vm43, 1, 0
    %v48 = vcvt.s32.f32 %v44
    %v49 = vcvt.s32.f32 %v45
    %v50 = vcvt.s32.f32 %v46
    %v51 = vcvt.s32.f32 %v47
    %v52 = vsel %vm27, %v48, 0.0
    %53 = vadd.xlane.f32.xlu0 %v52
    %v54 = vpop.xlane.xlu0 %53
    %v55 = vsel %vm27, %v49, 0.0
    %56 = vadd.xlane.f32.xlu0 %v55
    %v57 = vpop.xlane.xlu0 %56
    %v58 = vsel %vm27, %v50, 0.0
    %59 = vadd.xlane.f32.xlu0 %v58
    %v60 = vpop.xlane.xlu0 %59
    %v61 = vsel %vm27, %v51, 0.0
    %62 = vadd.xlane.f32.xlu0 %v61
    %v63 = vpop.xlane.xlu0 %62
    %v64 = vrcp.pop %v54
    %v65 = vmul.f32 %v30, %v64
    %v66 = vrcp.pop %v57
    %v67 = vmul.f32 %v33, %v66
    %v68 = vrcp.pop %v60
    %v69 = vmul.f32 %v36, %v68
    %v70 = vrcp.pop %v63
    %v71 = vmul.f32 %v39, %v70
    %v76 = vlaneseq
    %v77 = vand.u32 %v76, 127
    %v78 = vlaneseq
    %v79 = vshrl.u32 %v78, 7
    %v80 = vsub.s32 %v77, %v79
    %v81 = vrot.slane %v65, %v80
    %v82 = vadd.s32 %v77, 4294967288
    %v83 = vlaneseq
    %v84 = vshrl.u32 %v83, 7
    %v85 = vsub.s32 %v82, %v84
    %v86 = vrot.slane %v67, %v85
    %vm87 = vcmask 130112
    %v88 = vsel %vm87, %v86, %v81
    %v89 = vadd.s32 %v77, 4294967280
    %v90 = vlaneseq
    %v91 = vshrl.u32 %v90, 7
    %v92 = vsub.s32 %v89, %v91
    %v93 = vrot.slane %v69, %v92
    %vm94 = vcmask 195712
    %v95 = vsel %vm94, %v93, %v88
    %v96 = vadd.s32 %v77, 4294967272
    %v97 = vlaneseq
    %v98 = vshrl.u32 %v97, 7
    %v99 = vsub.s32 %v96, %v98
    %v100 = vrot.slane %v71, %v99
    %vm101 = vcmask 261312
    %v102 = vsel %vm101, %v100, %v95
    %vm104 = vcmask 253952
    %105 = vst.msk [vmem:[#allocation5] sm:$0x1] %vm104, %v102
    // Predicated region
    $region10: #{tpu_custom_call.1} parent=1 // pred_check
      _
    $region11: #{tpu_custom_call.1} parent=1 // pred_check_branch
      %107 = sbr.rel (0) target = $region13
    $region12: #{tpu_custom_call.1} parent=1 // pred_region
      %s109 = ssub.s32 16, 16
      %110 = vsyncadd [#allocation4], %s109
      %s112 = sshll.u32 [#allocation5], 4
      %s113 = int_to_ptr.vmem [resolvable:$true] %s112
      %115 = dma.vmem_to_hbm [thread:$0]  %s113, 16, %s1, [#allocation4]
    $region13: #{tpu_custom_call.1} parent=1 // pred_fallthru
      _
    // Predicated region
    $region14: #{tpu_custom_call.1} parent=1 // pred_check
      _
    $region15: #{tpu_custom_call.1} parent=1 // pred_check_branch
      %117 = sbr.rel (0) target = $region17
    $region16: #{tpu_custom_call.1} parent=1 // pred_region
      %118 = dma.done [#allocation4], 16
    $region17: #{tpu_custom_call.1} parent=1 // pred_fallthru
      _
    %119 = vsyncpa [#allocation3], 1
    %120 = vsyncpa [#allocation4], 1

</llo_original>
